<compile_context>
chip_gen: v7x
topology: tpu7x:2x2x1
jax: 0.10.0
libtpu: 0.0.40
codegen_flags: <defaults>
</compile_context>

<pallas_src>
import math

import jax
import jax.numpy as jnp
from jax import lax
from jax.experimental import pallas as pl
from jax.experimental.pallas import tpu as pltpu


# ---------------------------------------------------------------------------
# Helpers
# ---------------------------------------------------------------------------
def _cdiv(a, b):
    return -(-a // b)


def _round_up(x, m):
    return ((x + m - 1) // m) * m


def _pick_tile(rows, row_bytes, block_bytes, min_steps=4):
    """Tile size in rows: multiple of 128 (or == rows when rows <= 128),
    bounded by block_bytes, and leaving >= min_steps grid steps when there is
    enough work (so v7x's two TensorCores both get tiles)."""
    if rows <= 128:
        return rows
    tile = max(128, (block_bytes // row_bytes) // 128 * 128)
    tile = min(tile, max(128, _round_up(_cdiv(rows, min_steps), 128)))
    tile = min(tile, _round_up(rows, 128))
    return tile


def _vmem_limit_bytes():
    """Half of physical VMEM, clamped to [32 MiB, 64 MiB]."""
    try:
        cap = int(pltpu.get_tpu_info().vmem_capacity_bytes)
    except Exception:  # conservative fallback
        cap = 64 * 1024 * 1024
    return int(min(64 * 1024 * 1024, max(32 * 1024 * 1024, cap // 2)))


# ---------------------------------------------------------------------------
# Kernels (activation fused via closure)
# ---------------------------------------------------------------------------
def _make_packed_kernel(activation):
    # Contract the 128-lane axis of both operands (A @ B^T, flash-attn style).
    dn = (((1,), (1,)), ((), ()))

    def kernel(t1_ref, t2_ref, w_ref, b_ref, o_ref):
        # t1_ref / t2_ref : (tile_r, 128) packed tiles (g = 128//D rows/lane-row)
        # w_ref           : (3, g, 128) weights folded into the 0/1 selector:
        #                   w_ref[c, j, k] = w_c[k % D] if k // D == j else 0
        # b_ref           : (1,) bias scalar in SMEM
        # o_ref           : (g, tile_r) lane-dense output tile (logical row
        #                   i*g + j lands at o[j, i])
        t1 = t1_ref[...]
        t2 = t2_ref[...]
        red = lax.dot_general(w_ref[0], t1, dn, preferred_element_type=jnp.float32)
        red = red + lax.dot_general(w_ref[1], t2, dn, preferred_element_type=jnp.float32)
        red = red + lax.dot_general(w_ref[2], t1 * t2, dn, preferred_element_type=jnp.float32)
        red = red + b_ref[0]
        if activation is not None:
            red = activation(red)
        o_ref[...] = red.astype(o_ref.dtype)

    return kernel


def _make_rowsum_kernel(activation):
    def kernel(t1_ref, t2_ref, w_ref, b_ref, o_ref):
        # t1_ref / t2_ref : (tile_n, D)
        # w_ref           : (3, D, 1) weight columns
        # b_ref           : (1,) bias scalar in SMEM
        # o_ref           : (tile_n, 1)
        t1 = t1_ref[...]
        t2 = t2_ref[...]
        red = jnp.dot(t1, w_ref[0], preferred_element_type=jnp.float32)
        red = red + jnp.dot(t2, w_ref[1], preferred_element_type=jnp.float32)
        red = red + jnp.dot(t1 * t2, w_ref[2], preferred_element_type=jnp.float32)
        red = red + b_ref[0]
        if activation is not None:
            red = activation(red)
        o_ref[...] = red.astype(o_ref.dtype)

    return kernel


# ---------------------------------------------------------------------------
# Wrapper
# ---------------------------------------------------------------------------
def trilinear_similarity(tensor_1, tensor_2, weight_vector, bias, activation=None,
                         *, block_bytes=4 << 20):
    """tensor_1, tensor_2: [..., D]; weight_vector: [3*D]; bias: [1] (or scalar)."""
    assert tensor_1.shape == tensor_2.shape, "tensor_1/tensor_2 must have equal shapes"
    *lead, D = tensor_1.shape
    N = 1
    for s in lead:
        N *= s

    dtype = tensor_1.dtype
    itemsize = jnp.dtype(dtype).itemsize

    if N == 0:
        return jnp.zeros(tuple(lead), dtype)

    t1 = tensor_1.reshape(N, D)
    t2 = tensor_2.reshape(N, D)
    w = weight_vector.reshape(3, D).astype(dtype)
    b = jnp.asarray(bias, jnp.float32).reshape(1)

    compiler_params = pltpu.CompilerParams(
        dimension_semantics=("parallel",),       # megacore-shardable on v7x
        vmem_limit_bytes=_vmem_limit_bytes(),
    )

    use_packed = (D <= 128) and (128 % D == 0) and ((N * D) % 128 == 0)

    if use_packed:
        # -------- packed path: g logical rows per 128-lane row --------
        g = 128 // D
        R = (N * D) // 128
        # Free row-major bitcast reshape: logical row i*g + j occupies packed
        # row i, lanes [j*D, (j+1)*D).  No padding, no HBM copy.
        t1p = t1.reshape(R, 128)
        t2p = t2.reshape(R, 128)

        # Weights folded into the 0/1 block selector: (3, g, 128).
        lane = jnp.arange(128, dtype=jnp.int32)
        w_lane = w[:, lane % D]                                        # (3, 128)
        sel = (lane[None, :] // D == jnp.arange(g, dtype=jnp.int32)[:, None])
        w_sel = (w_lane[:, None, :] * sel[None, :, :].astype(dtype)).astype(dtype)

        tile_r = _pick_tile(R, 128 * itemsize, block_bytes)
        grid = (_cdiv(R, tile_r),)

        out = pl.pallas_call(
            _make_packed_kernel(activation),
            out_shape=jax.ShapeDtypeStruct((g, R), dtype),
            grid=grid,
            in_specs=[
                pl.BlockSpec((tile_r, 128), lambda i: (i, 0)),   # tensor_1 (packed)
                pl.BlockSpec((tile_r, 128), lambda i: (i, 0)),   # tensor_2 (packed)
                pl.BlockSpec((3, g, 128), lambda i: (0, 0, 0)),  # folded weights (resident)
                pl.BlockSpec(memory_space=pltpu.SMEM),           # bias scalar
            ],
            out_specs=pl.BlockSpec((g, tile_r), lambda i: (0, i)),  # lane-dense
            compiler_params=compiler_params,
        )(t1p, t2p, w_sel, b)
        # Tiny (N-element) relayout back to logical row order.
        flat = out.T.reshape(N)
    else:
        # -------- general-D fallback path (also handles the N % g != 0 tail) --
        lane_row_bytes = _round_up(D, 128) * itemsize   # VMEM row bytes (lane padded)
        tile_n = _pick_tile(N, lane_row_bytes, block_bytes)
        grid = (_cdiv(N, tile_n),)
        w_cols = w.reshape(3, D, 1)

        out = pl.pallas_call(
            _make_rowsum_kernel(activation),
            out_shape=jax.ShapeDtypeStruct((N, 1), dtype),
            grid=grid,
            in_specs=[
                pl.BlockSpec((tile_n, D), lambda i: (i, 0)),     # tensor_1 tile
                pl.BlockSpec((tile_n, D), lambda i: (i, 0)),     # tensor_2 tile
                pl.BlockSpec((3, D, 1), lambda i: (0, 0, 0)),    # weight columns (resident)
                pl.BlockSpec(memory_space=pltpu.SMEM),           # bias scalar
            ],
            out_specs=pl.BlockSpec((tile_n, 1), lambda i: (i, 0)),
            compiler_params=compiler_params,
        )(t1, t2, w_cols, b)
        flat = out.reshape(N)

    return flat.reshape(tuple(lead))


# ---------------------------------------------------------------------------
# Self-test
# ---------------------------------------------------------------------------
if __name__ == "__main__":
    def reference(t1, t2, w, b, activation=None):
        # Pure-JAX reference (mirrors the PyTorch forward), computed in f32.
        t1 = t1.astype(jnp.float32)
        t2 = t2.astype(jnp.float32)
        combined = jnp.concatenate([t1, t2, t1 * t2], axis=-1)
        r = jnp.matmul(combined, w.astype(jnp.float32)) + b
        if activation is not None:
            r = activation(r)
        return r

    def make_case(key, lead_shape, D, dtype):
        k1, k2, k3 = jax.random.split(key, 3)
        # Matches reset_parameters(): std = sqrt(6/(3D+1)); weight ~ U(-std, std); bias = 0
        std = math.sqrt(6.0 / (3 * D + 1))
        w = jax.random.uniform(k3, (3 * D,), jnp.float32, -std, std)
        b = jnp.zeros((1,), jnp.float32)
        t1 = jax.random.normal(k1, (*lead_shape, D), jnp.float32).astype(dtype)
        t2 = jax.random.normal(k2, (*lead_shape, D), jnp.float32).astype(dtype)
        return t1, t2, w, b

    key = jax.random.PRNGKey(0)

    # (lead_shape, D, dtype, activation, kwargs, atol, rtol)
    cases = [
        ((2, 8), 32, jnp.float32, None, {}, 2e-3, 2e-3),                 # packed, single step
        ((8, 128), 32, jnp.float32, jax.nn.relu,
         {"block_bytes": 128 * 128 * 4}, 2e-3, 2e-3),                    # packed, multi-step grid
        ((10, 100), 32, jnp.float32, None, {}, 2e-3, 2e-3),              # packed, ragged last tile
        ((4, 64), 64, jnp.bfloat16, None, {}, 5e-2, 5e-2),               # packed, bf16 (MXU f32 acc)
        ((2, 7), 48, jnp.float32, None, {}, 2e-3, 2e-3),                 # fallback, small N
        ((3, 100), 200, jnp.float32, jax.nn.relu,
         {"block_bytes": 128 * 1024}, 2e-3, 2e-3),                       # fallback, ragged multi-step
        ((5,), 32, jnp.float32, None, {}, 2e-3, 2e-3),                   # small D but N % g != 0
    ]
    keys = jax.random.split(key, len(cases))

    for ck, (lead_shape, D, dtype, act, kwargs, atol, rtol) in zip(keys, cases):
        t1, t2, w, b = make_case(ck, lead_shape, D, dtype)
        out = trilinear_similarity(t1, t2, w, b, activation=act, **kwargs)
        out = jax.block_until_ready(out)
        ref = reference(t1, t2, w, b, activation=act)
        assert out.shape == tuple(lead_shape), (out.shape, lead_shape)
        out_f32 = out.astype(jnp.float32)
        assert jnp.allclose(out_f32, ref, atol=atol, rtol=rtol), (
            f"mismatch vs reference for lead={lead_shape}, D={D}, dtype={dtype}: "
            f"max abs err={float(jnp.max(jnp.abs(out_f32 - ref)))}")

    print("KERNEL_OK")
</pallas_src>

<mosaic_0001>
module attributes {stable_mosaic.version = 11 : i64} {
  func.func @kernel(%arg0: i32, %arg1: memref<4x128xf32, #tpu.memory_space<vmem>>, %arg2: memref<4x128xf32, #tpu.memory_space<vmem>>, %arg3: memref<3x4x128xf32, #tpu.memory_space<vmem>>, %arg4: memref<1xf32, #tpu.memory_space<smem>>, %arg5: memref<4x4xf32, #tpu.memory_space<vmem>>) attributes {dimension_semantics = [#tpu.dimension_semantics<parallel>], iteration_bounds = array<i64: 1>, scalar_prefetch = 0 : i64, scratch_operands = 0 : i64, tpu.core_type = #tpu.core_type<tc>, window_params = [{transform_indices = @transform_0, window_bounds = array<i64: 4, 128>}, {transform_indices = @transform_1, window_bounds = array<i64: 4, 128>}, {pipeline_mode = #tpu.pipeline_mode<synchronous>, transform_indices = @transform_2, window_bounds = array<i64: 3, 4, 128>}, {transform_indices = @transform_3, window_bounds = array<i64: 1>}, {transform_indices = @transform_4, window_bounds = array<i64: 4, 4>}]} {
    %c0 = arith.constant 0 : index
    %c0_0 = arith.constant 0 : index
    %0 = vector.load %arg1[%c0, %c0_0] : memref<4x128xf32, #tpu.memory_space<vmem>>, vector<4x128xf32>
    %c0_1 = arith.constant 0 : index
    %c0_2 = arith.constant 0 : index
    %1 = vector.load %arg2[%c0_1, %c0_2] : memref<4x128xf32, #tpu.memory_space<vmem>>, vector<4x128xf32>
    %c0_3 = arith.constant 0 : index
    %c0_4 = arith.constant 0 : index
    %c0_5 = arith.constant 0 : index
    %2 = vector.load %arg3[%c0_3, %c0_4, %c0_5] : memref<3x4x128xf32, #tpu.memory_space<vmem>>, vector<1x4x128xf32>
    %3 = vector.shape_cast %2 : vector<1x4x128xf32> to vector<4x128xf32>
    %cst = arith.constant dense<0.000000e+00> : vector<4x4xf32>
    %4 = tpu.matmul %3, %0, %cst {dimension_numbers = #tpu.dot_dimension_numbers<[1], [1], [0], [0], [0, 0, 1, 0], [], []>} : vector<4x128xf32>, vector<4x128xf32>, vector<4x4xf32> -> vector<4x4xf32>
    %c1 = arith.constant 1 : index
    %c0_6 = arith.constant 0 : index
    %c0_7 = arith.constant 0 : index
    %5 = vector.load %arg3[%c1, %c0_6, %c0_7] : memref<3x4x128xf32, #tpu.memory_space<vmem>>, vector<1x4x128xf32>
    %6 = vector.shape_cast %5 : vector<1x4x128xf32> to vector<4x128xf32>
    %cst_8 = arith.constant dense<0.000000e+00> : vector<4x4xf32>
    %7 = tpu.matmul %6, %1, %cst_8 {dimension_numbers = #tpu.dot_dimension_numbers<[1], [1], [0], [0], [0, 0, 1, 0], [], []>} : vector<4x128xf32>, vector<4x128xf32>, vector<4x4xf32> -> vector<4x4xf32>
    %8 = arith.addf %4, %7 : vector<4x4xf32>
    %c2 = arith.constant 2 : index
    %c0_9 = arith.constant 0 : index
    %c0_10 = arith.constant 0 : index
    %9 = vector.load %arg3[%c2, %c0_9, %c0_10] : memref<3x4x128xf32, #tpu.memory_space<vmem>>, vector<1x4x128xf32>
    %10 = vector.shape_cast %9 : vector<1x4x128xf32> to vector<4x128xf32>
    %11 = arith.mulf %0, %1 : vector<4x128xf32>
    %cst_11 = arith.constant dense<0.000000e+00> : vector<4x4xf32>
    %12 = tpu.matmul %10, %11, %cst_11 {dimension_numbers = #tpu.dot_dimension_numbers<[1], [1], [0], [0], [0, 0, 1, 0], [], []>} : vector<4x128xf32>, vector<4x128xf32>, vector<4x4xf32> -> vector<4x4xf32>
    %13 = arith.addf %8, %12 : vector<4x4xf32>
    %c0_12 = arith.constant 0 : index
    %14 = memref.load %arg4[%c0_12] : memref<1xf32, #tpu.memory_space<smem>>
    %15 = vector.broadcast %14 : f32 to vector<4x4xf32>
    %16 = arith.addf %13, %15 : vector<4x4xf32>
    %c0_13 = arith.constant 0 : index
    %c0_14 = arith.constant 0 : index
    %17 = vector.load %arg5[%c0_13, %c0_14] : memref<4x4xf32, #tpu.memory_space<vmem>>, vector<4x4xf32>
    tpu.vector_store %arg5[%c0_13, %c0_14], %16 {strides = array<i32>} : memref<4x4xf32, #tpu.memory_space<vmem>>, vector<4x4xf32>,
    return
  }
  func.func @transform_0(%arg0: i32) -> (i32, i32) {
    %c0_i32 = arith.constant 0 : i32
    %c0_i32_0 = arith.constant 0 : i32
    return %arg0, %c0_i32 : i32, i32
  }
  func.func @transform_1(%arg0: i32) -> (i32, i32) {
    %c0_i32 = arith.constant 0 : i32
    %c0_i32_0 = arith.constant 0 : i32
    return %arg0, %c0_i32 : i32, i32
  }
  func.func @transform_2(%arg0: i32) -> (i32, i32, i32) {
    %c0_i32 = arith.constant 0 : i32
    %c0_i32_0 = arith.constant 0 : i32
    %c0_i32_1 = arith.constant 0 : i32
    %c0_i32_2 = arith.constant 0 : i32
    return %c0_i32, %c0_i32_0, %c0_i32_1 : i32, i32, i32
  }
  func.func @transform_3(%arg0: i32) -> i32 {
    %c0_i32 = arith.constant 0 : i32
    %c0_i32_0 = arith.constant 0 : i32
    return %c0_i32 : i32
  }
  func.func @transform_4(%arg0: i32) -> (i32, i32) {
    %c0_i32 = arith.constant 0 : i32
    %c0_i32_0 = arith.constant 0 : i32
    return %c0_i32, %arg0 : i32, i32
  }
}

</mosaic_0001>

<llo_original>
// kernel: tpu_custom_call.1
$region0: #{tpu_custom_call.1}
  #allocation0 [shape = 'u32[]', space=smem, size = 0x4, offset = 0x4, fixed_abs, tag = 'smem constant byte address 0x4 - core index']
  #allocation1 [shape = 'u32[144,128]{1,0:T(1,128)}', space=vmem, size = 0x12000, scoped, tag = 'internal scratch']
  #allocation2 [shape = 'f32[1]{0:T(128)S(6)}', space=smem, size = 0x200, scoped, tag = 'scoped memory for tpu_custom_call.1']
  %s0 = inlined_call_operand.hbm [shape: f32[4,128], index: 0, kind: input, shape index: {}]
  %s1 = inlined_call_operand.vmem [shape: f32[4,128], index: 1, kind: input, shape index: {}]
  %s2 = inlined_call_operand.hbm [shape: f32[3,4,128], index: 2, kind: input, shape index: {}]
  %s3 = inlined_call_operand.<no memory space> [shape: f32[1], index: 3, kind: input, shape index: {}]
  %s4 = inlined_call_operand.hbm [shape: f32[4,4], index: 4, kind: output, shape index: {}]
  %s5 = sld [smem:[#allocation0]]
  $region34: #{tpu_custom_call.1} parent=0
    _
  %s7 = ssub.s32 1, %s5
  %s8 = scalar_select 0, %s7, %s5
  %9 = sst [smem:[#allocation2]] %s3
  $region1: #{tpu_custom_call.1} parent=0
    #allocation3 [shape = 'u8[2048]{0}', space=vmem, size = 0x800, scoped, tag = 'input window, operand 0, single buffered']
    #allocation4 [shape = 's32[1]{0}', space=sflag, size = 0x4, scoped, tag = 'scoped memory for tpu_custom_call.1']
    #allocation5 [shape = 's32[1]{0}', space=sflag, size = 0x4, scoped, tag = 'scoped memory for tpu_custom_call.1']
    #allocation6 [shape = 'u8[6144]{0}', space=vmem, size = 0x1800, scoped, tag = 'input window, operand 2, single buffered']
    #allocation7 [shape = 's32[1]{0}', space=sflag, size = 0x4, scoped, tag = 'scoped memory for tpu_custom_call.1']
    #allocation8 [shape = 'u8[2048]{0}', space=vmem, size = 0x800, scoped, tag = 'output window, operand 0, single buffered']
    %10 = vsyncpa [#allocation4], 0
    %11 = vsyncpa [#allocation7], 0
    %12 = vsyncpa [#allocation5], 0
    // Predicated region
    $region2: #{tpu_custom_call.1} parent=1 // pred_check
      _
    $region3: #{tpu_custom_call.1} parent=1 // pred_check_branch
      %14 = sbr.rel (0) target = $region5
    $region4: #{tpu_custom_call.1} parent=1 // pred_region
      %s16 = ssub.s32 64, 64
      %17 = vsyncadd [#allocation4], %s16
      %s19 = sshll.u32 [#allocation3], 4
      %s20 = int_to_ptr.vmem [resolvable:$true] %s19
      %22 = dma.hbm_to_vmem [thread:$0]  %s0, 64, %s20, [#allocation4]
    $region5: #{tpu_custom_call.1} parent=1 // pred_fallthru
      _
    // Predicated region
    $region6: #{tpu_custom_call.1} parent=1 // pred_check
      _
    $region7: #{tpu_custom_call.1} parent=1 // pred_check_branch
      %24 = sbr.rel (0) target = $region9
    $region8: #{tpu_custom_call.1} parent=1 // pred_region
      _
    $region9: #{tpu_custom_call.1} parent=1 // pred_fallthru
      _
    // Predicated region
    $region10: #{tpu_custom_call.1} parent=1 // pred_check
      _
    $region11: #{tpu_custom_call.1} parent=1 // pred_check_branch
      %26 = sbr.rel (0) target = $region13
    $region12: #{tpu_custom_call.1} parent=1 // pred_region
      %s28 = ssub.s32 192, 192
      %29 = vsyncadd [#allocation7], %s28
      %s30 = sshll.u32 [#allocation6], 4
      %s31 = int_to_ptr.vmem [resolvable:$true] %s30
      %36 = dma.hbm_to_vmem [thread:$0]  %s2, 192, %s31, [#allocation7], 64, 64, 4
    $region13: #{tpu_custom_call.1} parent=1 // pred_fallthru
      _
    // Predicated region
    $region14: #{tpu_custom_call.1} parent=1 // pred_check
      _
    $region15: #{tpu_custom_call.1} parent=1 // pred_check_branch
      %38 = sbr.rel (0) target = $region17
    $region16: #{tpu_custom_call.1} parent=1 // pred_region
      _
    $region17: #{tpu_custom_call.1} parent=1 // pred_fallthru
      _
    // Predicated region
    $region18: #{tpu_custom_call.1} parent=1 // pred_check
      _
    $region19: #{tpu_custom_call.1} parent=1 // pred_check_branch
      %40 = sbr.rel (0) target = $region21
    $region20: #{tpu_custom_call.1} parent=1 // pred_region
      %41 = dma.done [#allocation4], 64
    $region21: #{tpu_custom_call.1} parent=1 // pred_fallthru
      _
    // Predicated region
    $region22: #{tpu_custom_call.1} parent=1 // pred_check
      _
    $region23: #{tpu_custom_call.1} parent=1 // pred_check_branch
      %43 = sbr.rel (0) target = $region25
    $region24: #{tpu_custom_call.1} parent=1 // pred_region
      %44 = dma.done [#allocation7], 192
    $region25: #{tpu_custom_call.1} parent=1 // pred_fallthru
      _
    %v45 = vld [vmem:[#allocation3] sm:$0xf]
    %v46 = vld [vmem:[%s1] sm:$0xf]
    %v47 = vld [vmem:[#allocation6] sm:$0xf]
    %s48 = scalar_lea.vmem [#allocation6], 4
    %v49 = vld [vmem:[%s48] sm:$0xf]
    %50 = vmatprep.subr.mxu0 0.0
    %51 = vmatpush1.xpose.msra.mxu0 %v46
    %52 = vmatprep.subr.mxu0 0.0
    %53 = vmatpush1.xpose.msra.mxu0 0.0
    %54 = vmatprep.subr.mxu0 0.0
    %55 = vmatpush1.xpose.msra.mxu0 0.0
    %56 = vmatprep.subr.mxu0 0.0
    %57 = vmatpush1.xpose.msra.mxu0 0.0
    %58 = vmatprep.subr.mxu0 0.0
    %59 = vmatpush1.xpose.msra.mxu0 0.0
    %60 = vmatprep.subr.mxu0 0.0
    %61 = vmatpush1.xpose.msra.mxu0 0.0
    %62 = vmatprep.subr.mxu0 0.0
    %63 = vmatpush1.xpose.msra.mxu0 0.0
    %64 = vmatprep.subr.mxu0 0.0
    %65 = vmatpush1.xpose.msra.mxu0 0.0
    %66 = vmatprep.subr.mxu0 0.0
    %67 = vmatpush1.xpose.msra.mxu0 0.0
    %68 = vmatprep.subr.mxu0 0.0
    %69 = vmatpush1.xpose.msra.mxu0 0.0
    %70 = vmatprep.subr.mxu0 0.0
    %71 = vmatpush1.xpose.msra.mxu0 0.0
    %72 = vmatprep.subr.mxu0 0.0
    %73 = vmatpush1.xpose.msra.mxu0 0.0
    %74 = vmatprep.subr.mxu0 0.0
    %75 = vmatpush1.xpose.msra.mxu0 0.0
    %76 = vmatprep.subr.mxu0 0.0
    %77 = vmatpush1.xpose.msra.mxu0 0.0
    %78 = vmatprep.subr.mxu0 0.0
    %79 = vmatpush1.xpose.msra.mxu0 0.0
    %80 = vmatprep.subr.mxu0 0.0
    %81 = vmatpush1.xpose.msra.mxu0 0.0
    %82 = vmatprep.subr.mxu0 0.0
    %83 = vmatpush1.xpose.msra.mxu0 0.0
    %84 = vmatprep.subr.mxu0 0.0
    %85 = vmatpush1.xpose.msra.mxu0 0.0
    %86 = vmatprep.subr.mxu0 0.0
    %87 = vmatpush1.xpose.msra.mxu0 0.0
    %88 = vmatprep.subr.mxu0 0.0
    %89 = vmatpush1.xpose.msra.mxu0 0.0
    %90 = vmatprep.subr.mxu0 0.0
    %91 = vmatpush1.xpose.msra.mxu0 0.0
    %92 = vmatprep.subr.mxu0 0.0
    %93 = vmatpush1.xpose.msra.mxu0 0.0
    %94 = vmatprep.subr.mxu0 0.0
    %95 = vmatpush1.xpose.msra.mxu0 0.0
    %96 = vmatprep.subr.mxu0 0.0
    %97 = vmatpush1.xpose.msra.mxu0 0.0
    %98 = vmatprep.subr.mxu0 0.0
    %99 = vmatpush1.xpose.msra.mxu0 0.0
    %100 = vmatprep.subr.mxu0 0.0
    %101 = vmatpush1.xpose.msra.mxu0 0.0
    %102 = vmatprep.subr.mxu0 0.0
    %103 = vmatpush1.xpose.msra.mxu0 0.0
    %104 = vmatprep.subr.mxu0 0.0
    %105 = vmatpush1.xpose.msra.mxu0 0.0
    %106 = vmatprep.subr.mxu0 0.0
    %107 = vmatpush1.xpose.msra.mxu0 0.0
    %108 = vmatprep.subr.mxu0 0.0
    %109 = vmatpush1.xpose.msra.mxu0 0.0
    %110 = vmatprep.subr.mxu0 0.0
    %111 = vmatpush1.xpose.msra.mxu0 0.0
    %112 = vmatprep.subr.mxu0 0.0
    %113 = vmatpush1.xpose.msra.mxu0 0.0
    %114 = vmatprep.mubr.f32.mxu0 0.0
    %115 = vmatmul.mubr.f32.gmra.mrb[0].mxu0 %v49
    %v116 = vpop.f32.mrb[0].mxu0
    %v117 = vadd.f32 0.0, %v116
    %v118 = vpop.f32.mrb[0].mxu0
    %119 = vdwg.mxu0
    %120 = vmatprep.subr.mxu0 0.0
    %121 = vmatpush1.xpose.msra.mxu0 %v45
    %122 = vmatprep.subr.mxu0 0.0
    %123 = vmatpush1.xpose.msra.mxu0 0.0
    %124 = vmatprep.subr.mxu0 0.0
    %125 = vmatpush1.xpose.msra.mxu0 0.0
    %126 = vmatprep.subr.mxu0 0.0
    %127 = vmatpush1.xpose.msra.mxu0 0.0
    %128 = vmatprep.subr.mxu0 0.0
    %129 = vmatpush1.xpose.msra.mxu0 0.0
    %130 = vmatprep.subr.mxu0 0.0
    %131 = vmatpush1.xpose.msra.mxu0 0.0
    %132 = vmatprep.subr.mxu0 0.0
    %133 = vmatpush1.xpose.msra.mxu0 0.0
    %134 = vmatprep.subr.mxu0 0.0
    %135 = vmatpush1.xpose.msra.mxu0 0.0
    %136 = vmatprep.subr.mxu0 0.0
    %137 = vmatpush1.xpose.msra.mxu0 0.0
    %138 = vmatprep.subr.mxu0 0.0
    %139 = vmatpush1.xpose.msra.mxu0 0.0
    %140 = vmatprep.subr.mxu0 0.0
    %141 = vmatpush1.xpose.msra.mxu0 0.0
    %142 = vmatprep.subr.mxu0 0.0
    %143 = vmatpush1.xpose.msra.mxu0 0.0
    %144 = vmatprep.subr.mxu0 0.0
    %145 = vmatpush1.xpose.msra.mxu0 0.0
    %146 = vmatprep.subr.mxu0 0.0
    %147 = vmatpush1.xpose.msra.mxu0 0.0
    %148 = vmatprep.subr.mxu0 0.0
    %149 = vmatpush1.xpose.msra.mxu0 0.0
    %150 = vmatprep.subr.mxu0 0.0
    %151 = vmatpush1.xpose.msra.mxu0 0.0
    %152 = vmatprep.subr.mxu0 0.0
    %153 = vmatpush1.xpose.msra.mxu0 0.0
    %154 = vmatprep.subr.mxu0 0.0
    %155 = vmatpush1.xpose.msra.mxu0 0.0
    %156 = vmatprep.subr.mxu0 0.0
    %157 = vmatpush1.xpose.msra.mxu0 0.0
    %158 = vmatprep.subr.mxu0 0.0
    %159 = vmatpush1.xpose.msra.mxu0 0.0
    %160 = vmatprep.subr.mxu0 0.0
    %161 = vmatpush1.xpose.msra.mxu0 0.0
    %162 = vmatprep.subr.mxu0 0.0
    %163 = vmatpush1.xpose.msra.mxu0 0.0
    %164 = vmatprep.subr.mxu0 0.0
    %165 = vmatpush1.xpose.msra.mxu0 0.0
    %166 = vmatprep.subr.mxu0 0.0
    %167 = vmatpush1.xpose.msra.mxu0 0.0
    %168 = vmatprep.subr.mxu0 0.0
    %169 = vmatpush1.xpose.msra.mxu0 0.0
    %170 = vmatprep.subr.mxu0 0.0
    %171 = vmatpush1.xpose.msra.mxu0 0.0
    %172 = vmatprep.subr.mxu0 0.0
    %173 = vmatpush1.xpose.msra.mxu0 0.0
    %174 = vmatprep.subr.mxu0 0.0
    %175 = vmatpush1.xpose.msra.mxu0 0.0
    %176 = vmatprep.subr.mxu0 0.0
    %177 = vmatpush1.xpose.msra.mxu0 0.0
    %178 = vmatprep.subr.mxu0 0.0
    %179 = vmatpush1.xpose.msra.mxu0 0.0
    %180 = vmatprep.subr.mxu0 0.0
    %181 = vmatpush1.xpose.msra.mxu0 0.0
    %182 = vmatprep.subr.mxu0 0.0
    %183 = vmatpush1.xpose.msra.mxu0 0.0
    %184 = vmatprep.mubr.f32.mxu0 0.0
    %185 = vmatmul.mubr.f32.gmra.mrb[0].mxu0 %v47
    %v186 = vpop.f32.mrb[0].mxu0
    %v187 = vadd.f32 %v117, %v186
    %v188 = vpop.f32.mrb[0].mxu0
    %189 = vdwg.mxu0
    %s190 = scalar_lea.vmem [#allocation6], 8
    %v191 = vld [vmem:[%s190] sm:$0xf]
    %v192 = vmul.f32 %v45, %v46
    %193 = vmatprep.subr.mxu0 0.0
    %194 = vmatpush1.xpose.msra.mxu0 %v192
    %195 = vmatprep.subr.mxu0 0.0
    %196 = vmatpush1.xpose.msra.mxu0 0.0
    %197 = vmatprep.subr.mxu0 0.0
    %198 = vmatpush1.xpose.msra.mxu0 0.0
    %199 = vmatprep.subr.mxu0 0.0
    %200 = vmatpush1.xpose.msra.mxu0 0.0
    %201 = vmatprep.subr.mxu0 0.0
    %202 = vmatpush1.xpose.msra.mxu0 0.0
    %203 = vmatprep.subr.mxu0 0.0
    %204 = vmatpush1.xpose.msra.mxu0 0.0
    %205 = vmatprep.subr.mxu0 0.0
    %206 = vmatpush1.xpose.msra.mxu0 0.0
    %207 = vmatprep.subr.mxu0 0.0
    %208 = vmatpush1.xpose.msra.mxu0 0.0
    %209 = vmatprep.subr.mxu0 0.0
    %210 = vmatpush1.xpose.msra.mxu0 0.0
    %211 = vmatprep.subr.mxu0 0.0
    %212 = vmatpush1.xpose.msra.mxu0 0.0
    %213 = vmatprep.subr.mxu0 0.0
    %214 = vmatpush1.xpose.msra.mxu0 0.0
    %215 = vmatprep.subr.mxu0 0.0
    %216 = vmatpush1.xpose.msra.mxu0 0.0
    %217 = vmatprep.subr.mxu0 0.0
    %218 = vmatpush1.xpose.msra.mxu0 0.0
    %219 = vmatprep.subr.mxu0 0.0
    %220 = vmatpush1.xpose.msra.mxu0 0.0
    %221 = vmatprep.subr.mxu0 0.0
    %222 = vmatpush1.xpose.msra.mxu0 0.0
    %223 = vmatprep.subr.mxu0 0.0
    %224 = vmatpush1.xpose.msra.mxu0 0.0
    %225 = vmatprep.subr.mxu0 0.0
    %226 = vmatpush1.xpose.msra.mxu0 0.0
    %227 = vmatprep.subr.mxu0 0.0
    %228 = vmatpush1.xpose.msra.mxu0 0.0
    %229 = vmatprep.subr.mxu0 0.0
    %230 = vmatpush1.xpose.msra.mxu0 0.0
    %231 = vmatprep.subr.mxu0 0.0
    %232 = vmatpush1.xpose.msra.mxu0 0.0
    %233 = vmatprep.subr.mxu0 0.0
    %234 = vmatpush1.xpose.msra.mxu0 0.0
    %235 = vmatprep.subr.mxu0 0.0
    %236 = vmatpush1.xpose.msra.mxu0 0.0
    %237 = vmatprep.subr.mxu0 0.0
    %238 = vmatpush1.xpose.msra.mxu0 0.0
    %239 = vmatprep.subr.mxu0 0.0
    %240 = vmatpush1.xpose.msra.mxu0 0.0
    %241 = vmatprep.subr.mxu0 0.0
    %242 = vmatpush1.xpose.msra.mxu0 0.0
    %243 = vmatprep.subr.mxu0 0.0
    %244 = vmatpush1.xpose.msra.mxu0 0.0
    %245 = vmatprep.subr.mxu0 0.0
    %246 = vmatpush1.xpose.msra.mxu0 0.0
    %247 = vmatprep.subr.mxu0 0.0
    %248 = vmatpush1.xpose.msra.mxu0 0.0
    %249 = vmatprep.subr.mxu0 0.0
    %250 = vmatpush1.xpose.msra.mxu0 0.0
    %251 = vmatprep.subr.mxu0 0.0
    %252 = vmatpush1.xpose.msra.mxu0 0.0
    %253 = vmatprep.subr.mxu0 0.0
    %254 = vmatpush1.xpose.msra.mxu0 0.0
    %255 = vmatprep.subr.mxu0 0.0
    %256 = vmatpush1.xpose.msra.mxu0 0.0
    %257 = vmatprep.mubr.f32.mxu0 0.0
    %258 = vmatmul.mubr.f32.gmra.mrb[0].mxu0 %v191
    %v259 = vpop.f32.mrb[0].mxu0
    %v260 = vadd.f32 0.0, %v259
    %v261 = vpop.f32.mrb[0].mxu0
    %262 = vdwg.mxu0
    %v263 = vadd.f32 %v187, %v260
    %s264 = sld [smem:[#allocation2]]
    %v265 = vstv %s264
    %v266 = vadd.f32 %v263, %v265
    %vm267 = vcmask 27648
    %268 = vst.msk [vmem:[#allocation8] sm:$0xf] %vm267, %v266
    // Predicated region
    $region26: #{tpu_custom_call.1} parent=1 // pred_check
      _
    $region27: #{tpu_custom_call.1} parent=1 // pred_check_branch
      %270 = sbr.rel (0) target = $region29
    $region28: #{tpu_custom_call.1} parent=1 // pred_region
      %s272 = ssub.s32 64, 64
      %273 = vsyncadd [#allocation5], %s272
      %s275 = sshll.u32 [#allocation8], 4
      %s276 = int_to_ptr.vmem [resolvable:$true] %s275
      %278 = dma.vmem_to_hbm [thread:$0]  %s276, 64, %s4, [#allocation5]
    $region29: #{tpu_custom_call.1} parent=1 // pred_fallthru
      _
    // Predicated region
    $region30: #{tpu_custom_call.1} parent=1 // pred_check
      _
    $region31: #{tpu_custom_call.1} parent=1 // pred_check_branch
      %280 = sbr.rel (0) target = $region33
    $region32: #{tpu_custom_call.1} parent=1 // pred_region
      %281 = dma.done [#allocation5], 64
    $region33: #{tpu_custom_call.1} parent=1 // pred_fallthru
      _
    %282 = vsyncpa [#allocation4], 1
    %283 = vsyncpa [#allocation7], 1
    %284 = vsyncpa [#allocation5], 1

</llo_original>
